<compile_context>
chip_gen: v7x
topology: tpu7x:2x2x1
jax: 0.10.0
libtpu: 0.0.40
codegen_flags: <defaults>
</compile_context>

<pallas_src>
import jax
import jax.numpy as jnp
from jax.experimental import pallas as pl
from jax.experimental.pallas import tpu as pltpu

DIMS = [14, 512, 256, 128, 64, 32, 16, 1]
BIAS_PAD = 512   # each bias row padded to this width in the packed (7, 512) array
SUBLANE = 8      # minimum batch-tile granularity (f32 sublane height)


def _round_up(n, m):
    return ((n + m - 1) // m) * m


def mlp_kernel(x_ref, w1, w2, w3, w4, w5, w6, w7, b_ref, o_ref):
    """One batch tile: 6x (Linear + ReLU) then the final Linear.

    Weights are (in, out) and stay VMEM-resident (constant index_map).
    Matmuls run on the MXU with f32 accumulation; bias add + ReLU run in f32
    on the VPU, then activations are cast to the matmul dtype once per layer.
    The final (16 -> 1) result is relayouted to a lane-dense (1, 1, TB) row so
    the writeback is a tiny dense store.
    """
    h = x_ref[...].astype(w1.dtype)                 # (TB, 14)

    def layer(h, w_ref, k, width):
        y = jnp.dot(h, w_ref[...], preferred_element_type=jnp.float32)
        y = y + b_ref[k:k + 1, :width]              # f32 bias add, broadcasts rows
        return jnp.maximum(y, 0.0).astype(w_ref.dtype)

    h = layer(h, w1, 0, 512)
    h = layer(h, w2, 1, 256)
    h = layer(h, w3, 2, 128)
    h = layer(h, w4, 3, 64)
    h = layer(h, w5, 4, 32)
    h = layer(h, w6, 5, 16)

    # Final layer (no activation): (TB,16)@(16,1) -> (TB,1), then cheap
    # sublane->lane relayout to (1,1,TB) for an unmasked lane-dense store.
    y = jnp.dot(h, w7[...], preferred_element_type=jnp.float32)   # (TB, 1)
    y = y + b_ref[6:7, :1]
    o_ref[...] = y.reshape(1, 1, -1).astype(o_ref.dtype)


def make_params(key):
    """Deterministic nn.Linear-style init: U(-1/sqrt(fan_in), 1/sqrt(fan_in))."""
    params = []
    for i in range(len(DIMS) - 1):
        fan_in, fan_out = DIMS[i], DIMS[i + 1]
        key, kw, kb = jax.random.split(key, 3)
        bound = 1.0 / jnp.sqrt(jnp.float32(fan_in))
        w = jax.random.uniform(kw, (fan_in, fan_out), jnp.float32,
                               minval=-bound, maxval=bound)
        b = jax.random.uniform(kb, (1, fan_out), jnp.float32,
                               minval=-bound, maxval=bound)
        params.append((w, b))
    return params


def mlp_forward(x, params, *, block_batch=1024, matmul_dtype=jnp.bfloat16):
    batch = x.shape[0]
    x = x.astype(jnp.float32)

    # --- batch tile selection ------------------------------------------------
    # Large batches use the full block_batch (amortizes the ~0.35 us/step grid
    # overhead); smaller batches shrink the tile so we only pad to a sublane
    # multiple and (when possible) keep >= 2 grid steps for the v7x megacore.
    if batch >= 2 * block_batch:
        bb = block_batch
    else:
        bb = max(SUBLANE, _round_up(pl.cdiv(batch, 2), SUBLANE))
        bb = min(bb, block_batch)
    padded = _round_up(batch, bb)
    if padded != batch:
        x = jnp.pad(x, ((0, padded - batch), (0, 0)))
    grid = (padded // bb,)

    # --- pack parameters -------------------------------------------------------
    weights = [w.astype(matmul_dtype) for w, _ in params]
    bias_rows = [jnp.pad(b.reshape(1, -1).astype(jnp.float32),
                         ((0, 0), (0, BIAS_PAD - b.size))) for _, b in params]
    b_all = jnp.concatenate(bias_rows, axis=0)        # (7, 512) f32

    def resident(shape):
        # Constant block index across the grid => stays VMEM-resident, no re-DMA.
        return pl.BlockSpec(shape, lambda i: (0, 0))

    itemsize = jnp.dtype(matmul_dtype).itemsize
    w_elems = sum(a * b for a, b in zip(DIMS[:-1], DIMS[1:]))
    cost = pl.CostEstimate(
        flops=2 * w_elems * padded,
        transcendentals=0,
        bytes_accessed=(padded * DIMS[0] * 4      # x
                        + w_elems * itemsize       # weights
                        + b_all.size * 4           # packed biases
                        + padded * 4))             # true (unpadded-lane) output

    out = pl.pallas_call(
        mlp_kernel,
        out_shape=jax.ShapeDtypeStruct((grid[0], 1, bb), jnp.float32),
        grid=grid,
        in_specs=(
            [pl.BlockSpec((bb, DIMS[0]), lambda i: (i, 0))]
            + [resident(w.shape) for w in weights]
            + [resident(b_all.shape)]
        ),
        out_specs=pl.BlockSpec((1, 1, bb), lambda i: (i, 0, 0)),
        compiler_params=pltpu.CompilerParams(
            dimension_semantics=("parallel",)),
        cost_estimate=cost,
    )(x, *weights, b_all)

    # Strip batch padding; output is already 1 value per row (no lane padding).
    return out.reshape(-1)[:batch].reshape(batch, 1)


def mlp_reference(x, params, matmul_dtype=jnp.float32):
    """Pure-JAX reference (matching matmul operand dtype) for checking."""
    h = x.astype(jnp.float32)
    for i, (w, b) in enumerate(params):
        h = jnp.dot(h.astype(matmul_dtype), w.astype(matmul_dtype),
                    preferred_element_type=jnp.float32) + b
        if i < len(params) - 1:
            h = jnp.maximum(h, 0.0)
    return h


if __name__ == "__main__":
    key = jax.random.PRNGKey(0)
    key, kx = jax.random.split(key)
    params = make_params(key)

    batch = 8
    x = jax.random.normal(kx, (batch, DIMS[0]), jnp.float32)

    # f32-operand path: bit-close match vs. the PyTorch-semantics reference.
    out_f32 = jax.block_until_ready(
        mlp_forward(x, params, matmul_dtype=jnp.float32))
    ref_f32 = mlp_reference(x, params, matmul_dtype=jnp.float32)
    assert out_f32.shape == (batch, 1), out_f32.shape
    assert jnp.allclose(out_f32, ref_f32, atol=1e-4, rtol=1e-4), \
        f"f32 max abs err {jnp.max(jnp.abs(out_f32 - ref_f32))}"

    # Default fast path: bf16 MXU operands, f32 accumulation / bias / ReLU.
    out_bf16 = jax.block_until_ready(mlp_forward(x, params))
    ref_bf16 = mlp_reference(x, params, matmul_dtype=jnp.bfloat16)
    assert out_bf16.shape == (batch, 1), out_bf16.shape
    assert jnp.allclose(out_bf16, ref_bf16, atol=1e-2, rtol=1e-2), \
        f"bf16 max abs err {jnp.max(jnp.abs(out_bf16 - ref_bf16))}"

    # Multi-tile path (grid > 1, batch padding stripped correctly).
    batch2 = 40
    key, kx2 = jax.random.split(key)
    x2 = jax.random.normal(kx2, (batch2, DIMS[0]), jnp.float32)
    out2 = jax.block_until_ready(
        mlp_forward(x2, params, block_batch=16, matmul_dtype=jnp.float32))
    ref2 = mlp_reference(x2, params, matmul_dtype=jnp.float32)
    assert out2.shape == (batch2, 1), out2.shape
    assert jnp.allclose(out2, ref2, atol=1e-4, rtol=1e-4), \
        f"multi-tile max abs err {jnp.max(jnp.abs(out2 - ref2))}"

    print("KERNEL_OK")
</pallas_src>

<mosaic_0001>
module attributes {stable_mosaic.version = 11 : i64} {
  func.func @mlp_kernel(%arg0: i32, %arg1: memref<8x14xf32, #tpu.memory_space<vmem>>, %arg2: memref<14x512xf32, #tpu.memory_space<vmem>>, %arg3: memref<512x256xf32, #tpu.memory_space<vmem>>, %arg4: memref<256x128xf32, #tpu.memory_space<vmem>>, %arg5: memref<128x64xf32, #tpu.memory_space<vmem>>, %arg6: memref<64x32xf32, #tpu.memory_space<vmem>>, %arg7: memref<32x16xf32, #tpu.memory_space<vmem>>, %arg8: memref<16x1xf32, #tpu.memory_space<vmem>>, %arg9: memref<7x512xf32, #tpu.memory_space<vmem>>, %arg10: memref<1x1x8xf32, #tpu.memory_space<vmem>>) attributes {dimension_semantics = [#tpu.dimension_semantics<parallel>], iteration_bounds = array<i64: 1>, scalar_prefetch = 0 : i64, scratch_operands = 0 : i64, tpu.core_type = #tpu.core_type<tc>, window_params = [{transform_indices = @transform_0, window_bounds = array<i64: 8, 14>}, {pipeline_mode = #tpu.pipeline_mode<synchronous>, transform_indices = @transform_1, window_bounds = array<i64: 14, 512>}, {pipeline_mode = #tpu.pipeline_mode<synchronous>, transform_indices = @transform_2, window_bounds = array<i64: 512, 256>}, {pipeline_mode = #tpu.pipeline_mode<synchronous>, transform_indices = @transform_3, window_bounds = array<i64: 256, 128>}, {pipeline_mode = #tpu.pipeline_mode<synchronous>, transform_indices = @transform_4, window_bounds = array<i64: 128, 64>}, {pipeline_mode = #tpu.pipeline_mode<synchronous>, transform_indices = @transform_5, window_bounds = array<i64: 64, 32>}, {pipeline_mode = #tpu.pipeline_mode<synchronous>, transform_indices = @transform_6, window_bounds = array<i64: 32, 16>}, {pipeline_mode = #tpu.pipeline_mode<synchronous>, transform_indices = @transform_7, window_bounds = array<i64: 16, 1>}, {pipeline_mode = #tpu.pipeline_mode<synchronous>, transform_indices = @transform_8, window_bounds = array<i64: 7, 512>}, {transform_indices = @transform_9, window_bounds = array<i64: 1, 1, 8>}]} {
    %c0 = arith.constant 0 : index
    %c0_0 = arith.constant 0 : index
    %0 = vector.load %arg1[%c0, %c0_0] : memref<8x14xf32, #tpu.memory_space<vmem>>, vector<8x14xf32>
    %c0_1 = arith.constant 0 : index
    %c0_2 = arith.constant 0 : index
    %1 = vector.load %arg2[%c0_1, %c0_2] : memref<14x512xf32, #tpu.memory_space<vmem>>, vector<14x512xf32>
    %cst = arith.constant dense<0.000000e+00> : vector<8x512xf32>
    %2 = tpu.matmul %0, %1, %cst {dimension_numbers = #tpu.dot_dimension_numbers<[1], [0], [0], [1], [0, 0, 1, 1], [], []>} : vector<8x14xf32>, vector<14x512xf32>, vector<8x512xf32> -> vector<8x512xf32>
    %c0_3 = arith.constant 0 : index
    %c0_4 = arith.constant 0 : index
    %3 = vector.load %arg9[%c0_3, %c0_4] : memref<7x512xf32, #tpu.memory_space<vmem>>, vector<1x512xf32>
    %4 = vector.broadcast %3 : vector<1x512xf32> to vector<8x512xf32>
    %5 = arith.addf %2, %4 : vector<8x512xf32>
    %cst_5 = arith.constant 0.000000e+00 : f32
    %6 = vector.broadcast %cst_5 : f32 to vector<8x512xf32>
    %7 = arith.maximumf %5, %6 : vector<8x512xf32>
    %c0_6 = arith.constant 0 : index
    %c0_7 = arith.constant 0 : index
    %8 = vector.load %arg3[%c0_6, %c0_7] : memref<512x256xf32, #tpu.memory_space<vmem>>, vector<512x256xf32>
    %cst_8 = arith.constant dense<0.000000e+00> : vector<8x256xf32>
    %9 = tpu.matmul %7, %8, %cst_8 {dimension_numbers = #tpu.dot_dimension_numbers<[1], [0], [0], [1], [0, 0, 1, 1], [], []>} : vector<8x512xf32>, vector<512x256xf32>, vector<8x256xf32> -> vector<8x256xf32>
    %c1 = arith.constant 1 : index
    %c0_9 = arith.constant 0 : index
    %10 = vector.load %arg9[%c1, %c0_9] : memref<7x512xf32, #tpu.memory_space<vmem>>, vector<1x256xf32>
    %11 = vector.broadcast %10 : vector<1x256xf32> to vector<8x256xf32>
    %12 = arith.addf %9, %11 : vector<8x256xf32>
    %cst_10 = arith.constant 0.000000e+00 : f32
    %13 = vector.broadcast %cst_10 : f32 to vector<8x256xf32>
    %14 = arith.maximumf %12, %13 : vector<8x256xf32>
    %c0_11 = arith.constant 0 : index
    %c0_12 = arith.constant 0 : index
    %15 = vector.load %arg4[%c0_11, %c0_12] : memref<256x128xf32, #tpu.memory_space<vmem>>, vector<256x128xf32>
    %cst_13 = arith.constant dense<0.000000e+00> : vector<8x128xf32>
    %16 = tpu.matmul %14, %15, %cst_13 {dimension_numbers = #tpu.dot_dimension_numbers<[1], [0], [0], [1], [0, 0, 1, 1], [], []>} : vector<8x256xf32>, vector<256x128xf32>, vector<8x128xf32> -> vector<8x128xf32>
    %c2 = arith.constant 2 : index
    %c0_14 = arith.constant 0 : index
    %17 = vector.load %arg9[%c2, %c0_14] : memref<7x512xf32, #tpu.memory_space<vmem>>, vector<1x128xf32>
    %18 = vector.broadcast %17 : vector<1x128xf32> to vector<8x128xf32>
    %19 = arith.addf %16, %18 : vector<8x128xf32>
    %cst_15 = arith.constant 0.000000e+00 : f32
    %20 = vector.broadcast %cst_15 : f32 to vector<8x128xf32>
    %21 = arith.maximumf %19, %20 : vector<8x128xf32>
    %c0_16 = arith.constant 0 : index
    %c0_17 = arith.constant 0 : index
    %22 = vector.load %arg5[%c0_16, %c0_17] : memref<128x64xf32, #tpu.memory_space<vmem>>, vector<128x64xf32>
    %cst_18 = arith.constant dense<0.000000e+00> : vector<8x64xf32>
    %23 = tpu.matmul %21, %22, %cst_18 {dimension_numbers = #tpu.dot_dimension_numbers<[1], [0], [0], [1], [0, 0, 1, 1], [], []>} : vector<8x128xf32>, vector<128x64xf32>, vector<8x64xf32> -> vector<8x64xf32>
    %c3 = arith.constant 3 : index
    %c0_19 = arith.constant 0 : index
    %24 = vector.load %arg9[%c3, %c0_19] : memref<7x512xf32, #tpu.memory_space<vmem>>, vector<1x64xf32>
    %25 = vector.broadcast %24 : vector<1x64xf32> to vector<8x64xf32>
    %26 = arith.addf %23, %25 : vector<8x64xf32>
    %cst_20 = arith.constant 0.000000e+00 : f32
    %27 = vector.broadcast %cst_20 : f32 to vector<8x64xf32>
    %28 = arith.maximumf %26, %27 : vector<8x64xf32>
    %c0_21 = arith.constant 0 : index
    %c0_22 = arith.constant 0 : index
    %29 = vector.load %arg6[%c0_21, %c0_22] : memref<64x32xf32, #tpu.memory_space<vmem>>, vector<64x32xf32>
    %cst_23 = arith.constant dense<0.000000e+00> : vector<8x32xf32>
    %30 = tpu.matmul %28, %29, %cst_23 {dimension_numbers = #tpu.dot_dimension_numbers<[1], [0], [0], [1], [0, 0, 1, 1], [], []>} : vector<8x64xf32>, vector<64x32xf32>, vector<8x32xf32> -> vector<8x32xf32>
    %c4 = arith.constant 4 : index
    %c0_24 = arith.constant 0 : index
    %31 = vector.load %arg9[%c4, %c0_24] : memref<7x512xf32, #tpu.memory_space<vmem>>, vector<1x32xf32>
    %32 = vector.broadcast %31 : vector<1x32xf32> to vector<8x32xf32>
    %33 = arith.addf %30, %32 : vector<8x32xf32>
    %cst_25 = arith.constant 0.000000e+00 : f32
    %34 = vector.broadcast %cst_25 : f32 to vector<8x32xf32>
    %35 = arith.maximumf %33, %34 : vector<8x32xf32>
    %c0_26 = arith.constant 0 : index
    %c0_27 = arith.constant 0 : index
    %36 = vector.load %arg7[%c0_26, %c0_27] : memref<32x16xf32, #tpu.memory_space<vmem>>, vector<32x16xf32>
    %cst_28 = arith.constant dense<0.000000e+00> : vector<8x16xf32>
    %37 = tpu.matmul %35, %36, %cst_28 {dimension_numbers = #tpu.dot_dimension_numbers<[1], [0], [0], [1], [0, 0, 1, 1], [], []>} : vector<8x32xf32>, vector<32x16xf32>, vector<8x16xf32> -> vector<8x16xf32>
    %c5 = arith.constant 5 : index
    %c0_29 = arith.constant 0 : index
    %38 = vector.load %arg9[%c5, %c0_29] : memref<7x512xf32, #tpu.memory_space<vmem>>, vector<1x16xf32>
    %39 = vector.broadcast %38 : vector<1x16xf32> to vector<8x16xf32>
    %40 = arith.addf %37, %39 : vector<8x16xf32>
    %cst_30 = arith.constant 0.000000e+00 : f32
    %41 = vector.broadcast %cst_30 : f32 to vector<8x16xf32>
    %42 = arith.maximumf %40, %41 : vector<8x16xf32>
    %c0_31 = arith.constant 0 : index
    %c0_32 = arith.constant 0 : index
    %43 = vector.load %arg8[%c0_31, %c0_32] : memref<16x1xf32, #tpu.memory_space<vmem>>, vector<16x1xf32>
    %cst_33 = arith.constant dense<0.000000e+00> : vector<8x1xf32>
    %44 = tpu.matmul %42, %43, %cst_33 {dimension_numbers = #tpu.dot_dimension_numbers<[1], [0], [0], [1], [0, 0, 1, 1], [], []>} : vector<8x16xf32>, vector<16x1xf32>, vector<8x1xf32> -> vector<8x1xf32>
    %c6 = arith.constant 6 : index
    %c0_34 = arith.constant 0 : index
    %45 = vector.load %arg9[%c6, %c0_34] : memref<7x512xf32, #tpu.memory_space<vmem>>, vector<1x1xf32>
    %46 = vector.broadcast %45 : vector<1x1xf32> to vector<8x1xf32>
    %47 = arith.addf %44, %46 : vector<8x1xf32>
    %48 = vector.shape_cast %47 : vector<8x1xf32> to vector<1x1x8xf32>
    %c0_35 = arith.constant 0 : index
    %c0_36 = arith.constant 0 : index
    %c0_37 = arith.constant 0 : index
    %49 = vector.load %arg10[%c0_35, %c0_36, %c0_37] : memref<1x1x8xf32, #tpu.memory_space<vmem>>, vector<1x1x8xf32>
    tpu.vector_store %arg10[%c0_35, %c0_36, %c0_37], %48 {strides = array<i32>} : memref<1x1x8xf32, #tpu.memory_space<vmem>>, vector<1x1x8xf32>,
    return
  }
  func.func @transform_0(%arg0: i32) -> (i32, i32) {
    %c0_i32 = arith.constant 0 : i32
    %c0_i32_0 = arith.constant 0 : i32
    return %arg0, %c0_i32 : i32, i32
  }
  func.func @transform_1(%arg0: i32) -> (i32, i32) {
    %c0_i32 = arith.constant 0 : i32
    %c0_i32_0 = arith.constant 0 : i32
    %c0_i32_1 = arith.constant 0 : i32
    return %c0_i32, %c0_i32_0 : i32, i32
  }
  func.func @transform_2(%arg0: i32) -> (i32, i32) {
    %c0_i32 = arith.constant 0 : i32
    %c0_i32_0 = arith.constant 0 : i32
    %c0_i32_1 = arith.constant 0 : i32
    return %c0_i32, %c0_i32_0 : i32, i32
  }
  func.func @transform_3(%arg0: i32) -> (i32, i32) {
    %c0_i32 = arith.constant 0 : i32
    %c0_i32_0 = arith.constant 0 : i32
    %c0_i32_1 = arith.constant 0 : i32
    return %c0_i32, %c0_i32_0 : i32, i32
  }
  func.func @transform_4(%arg0: i32) -> (i32, i32) {
    %c0_i32 = arith.constant 0 : i32
    %c0_i32_0 = arith.constant 0 : i32
    %c0_i32_1 = arith.constant 0 : i32
    return %c0_i32, %c0_i32_0 : i32, i32
  }
  func.func @transform_5(%arg0: i32) -> (i32, i32) {
    %c0_i32 = arith.constant 0 : i32
    %c0_i32_0 = arith.constant 0 : i32
    %c0_i32_1 = arith.constant 0 : i32
    return %c0_i32, %c0_i32_0 : i32, i32
  }
  func.func @transform_6(%arg0: i32) -> (i32, i32) {
    %c0_i32 = arith.constant 0 : i32
    %c0_i32_0 = arith.constant 0 : i32
    %c0_i32_1 = arith.constant 0 : i32
    return %c0_i32, %c0_i32_0 : i32, i32
  }
  func.func @transform_7(%arg0: i32) -> (i32, i32) {
    %c0_i32 = arith.constant 0 : i32
    %c0_i32_0 = arith.constant 0 : i32
    %c0_i32_1 = arith.constant 0 : i32
    return %c0_i32, %c0_i32_0 : i32, i32
  }
  func.func @transform_8(%arg0: i32) -> (i32, i32) {
    %c0_i32 = arith.constant 0 : i32
    %c0_i32_0 = arith.constant 0 : i32
    %c0_i32_1 = arith.constant 0 : i32
    return %c0_i32, %c0_i32_0 : i32, i32
  }
  func.func @transform_9(%arg0: i32) -> (i32, i32, i32) {
    %c0_i32 = arith.constant 0 : i32
    %c0_i32_0 = arith.constant 0 : i32
    %c0_i32_1 = arith.constant 0 : i32
    return %arg0, %c0_i32, %c0_i32_0 : i32, i32, i32
  }
}

</mosaic_0001>

<llo_original>
// kernel: tpu_custom_call.1
$region0: #{tpu_custom_call.1}
  #allocation0 [shape = 'u32[]', space=smem, size = 0x4, offset = 0x4, fixed_abs, tag = 'smem constant byte address 0x4 - core index']
  #allocation1 [shape = 'u32[144,128]{1,0:T(1,128)}', space=vmem, size = 0x12000, scoped, tag = 'internal scratch']
  %s0 = inlined_call_operand.hbm [shape: f32[8,14], index: 0, kind: input, shape index: {}]
  %s1 = inlined_call_operand.hbm [shape: f32[14,512], index: 1, kind: input, shape index: {}]
  %s2 = inlined_call_operand.hbm [shape: f32[512,256], index: 2, kind: input, shape index: {}]
  %s3 = inlined_call_operand.vmem [shape: f32[256,128], index: 3, kind: input, shape index: {}]
  %s4 = inlined_call_operand.vmem [shape: f32[128,64], index: 4, kind: input, shape index: {}]
  %s5 = inlined_call_operand.vmem [shape: f32[64,32], index: 5, kind: input, shape index: {}]
  %s6 = inlined_call_operand.vmem [shape: f32[32,16], index: 6, kind: input, shape index: {}]
  %s7 = inlined_call_operand.vmem [shape: f32[16,1], index: 7, kind: input, shape index: {}]
  %s8 = inlined_call_operand.hbm [shape: f32[7,512], index: 8, kind: input, shape index: {}]
  %s9 = inlined_call_operand.hbm [shape: f32[1,1,8], index: 9, kind: output, shape index: {}]
  %s10 = sld [smem:[#allocation0]]
  $region62: #{tpu_custom_call.1} parent=0
    _
  %s12 = ssub.s32 1, %s10
  %s13 = scalar_select 0, %s12, %s10
  $region1: #{tpu_custom_call.1} parent=0
    #allocation2 [shape = 'u8[4096]{0}', space=vmem, size = 0x1000, scoped, tag = 'input window, operand 0, single buffered']
    #allocation3 [shape = 's32[1]{0}', space=sflag, size = 0x4, scoped, tag = 'scoped memory for tpu_custom_call.1']
    #allocation4 [shape = 's32[1]{0}', space=sflag, size = 0x4, scoped, tag = 'scoped memory for tpu_custom_call.1']
    #allocation5 [shape = 'u8[32768]{0}', space=vmem, size = 0x8000, scoped, tag = 'input window, operand 1, single buffered']
    #allocation6 [shape = 's32[1]{0}', space=sflag, size = 0x4, scoped, tag = 'scoped memory for tpu_custom_call.1']
    #allocation7 [shape = 'u8[524288]{0}', space=vmem, size = 0x80000, scoped, tag = 'input window, operand 2, single buffered']
    #allocation8 [shape = 'u8[16384]{0}', space=vmem, size = 0x4000, scoped, tag = 'input window, operand 8, single buffered']
    #allocation9 [shape = 's32[1]{0}', space=sflag, size = 0x4, scoped, tag = 'scoped memory for tpu_custom_call.1']
    #allocation10 [shape = 'u8[512]{0}', space=vmem, size = 0x400, scoped, tag = 'output window, operand 0, single buffered']
    %14 = vsyncpa [#allocation3], 0
    %15 = vsyncpa [#allocation6], 0
    %16 = vsyncpa [#allocation9], 0
    %17 = vsyncpa [#allocation4], 0
    // Predicated region
    $region2: #{tpu_custom_call.1} parent=1 // pred_check
      _
    $region3: #{tpu_custom_call.1} parent=1 // pred_check_branch
      %19 = sbr.rel (0) target = $region5
    $region4: #{tpu_custom_call.1} parent=1 // pred_region
      %s21 = ssub.s32 128, 128
      %22 = vsyncadd [#allocation3], %s21
      %s24 = sshll.u32 [#allocation2], 4
      %s25 = int_to_ptr.vmem [resolvable:$true] %s24
      %27 = dma.hbm_to_vmem [thread:$0]  %s0, 128, %s25, [#allocation3]
    $region5: #{tpu_custom_call.1} parent=1 // pred_fallthru
      _
    // Predicated region
    $region6: #{tpu_custom_call.1} parent=1 // pred_check
      _
    $region7: #{tpu_custom_call.1} parent=1 // pred_check_branch
      %29 = sbr.rel (0) target = $region9
    $region8: #{tpu_custom_call.1} parent=1 // pred_region
      %s31 = ssub.s32 1024, 1024
      %32 = vsyncadd [#allocation6], %s31
      %s33 = sshll.u32 [#allocation5], 4
      %s34 = int_to_ptr.vmem [resolvable:$true] %s33
      %39 = dma.hbm_to_vmem [thread:$0]  %s1, 1024, %s34, [#allocation6], 512, 512, 32
    $region9: #{tpu_custom_call.1} parent=1 // pred_fallthru
      _
    // Predicated region
    $region10: #{tpu_custom_call.1} parent=1 // pred_check
      _
    $region11: #{tpu_custom_call.1} parent=1 // pred_check_branch
      %41 = sbr.rel (0) target = $region13
    $region12: #{tpu_custom_call.1} parent=1 // pred_region
      %s43 = ssub.s32 16384, 16384
      %44 = vsyncadd [#allocation6], %s43
      %s45 = sshll.u32 [#allocation7], 4
      %s46 = int_to_ptr.vmem [resolvable:$true] %s45
      %51 = dma.hbm_to_vmem [thread:$0]  %s2, 16384, %s46, [#allocation6], 256, 256, 16
    $region13: #{tpu_custom_call.1} parent=1 // pred_fallthru
      _
    // Predicated region
    $region14: #{tpu_custom_call.1} parent=1 // pred_check
      _
    $region15: #{tpu_custom_call.1} parent=1 // pred_check_branch
      %53 = sbr.rel (0) target = $region17
    $region16: #{tpu_custom_call.1} parent=1 // pred_region
      _
    $region17: #{tpu_custom_call.1} parent=1 // pred_fallthru
      _
    // Predicated region
    $region18: #{tpu_custom_call.1} parent=1 // pred_check
      _
    $region19: #{tpu_custom_call.1} parent=1 // pred_check_branch
      %55 = sbr.rel (0) target = $region21
    $region20: #{tpu_custom_call.1} parent=1 // pred_region
      _
    $region21: #{tpu_custom_call.1} parent=1 // pred_fallthru
      _
    // Predicated region
    $region22: #{tpu_custom_call.1} parent=1 // pred_check
      _
    $region23: #{tpu_custom_call.1} parent=1 // pred_check_branch
      %57 = sbr.rel (0) target = $region25
    $region24: #{tpu_custom_call.1} parent=1 // pred_region
      _
    $region25: #{tpu_custom_call.1} parent=1 // pred_fallthru
      _
    // Predicated region
    $region26: #{tpu_custom_call.1} parent=1 // pred_check
      _
    $region27: #{tpu_custom_call.1} parent=1 // pred_check_branch
      %59 = sbr.rel (0) target = $region29
    $region28: #{tpu_custom_call.1} parent=1 // pred_region
      _
    $region29: #{tpu_custom_call.1} parent=1 // pred_fallthru
      _
    // Predicated region
    $region30: #{tpu_custom_call.1} parent=1 // pred_check
      _
    $region31: #{tpu_custom_call.1} parent=1 // pred_check_branch
      %61 = sbr.rel (0) target = $region33
    $region32: #{tpu_custom_call.1} parent=1 // pred_region
      _
    $region33: #{tpu_custom_call.1} parent=1 // pred_fallthru
      _
    // Predicated region
    $region34: #{tpu_custom_call.1} parent=1 // pred_check
      _
    $region35: #{tpu_custom_call.1} parent=1 // pred_check_branch
      %63 = sbr.rel (0) target = $region37
    $region36: #{tpu_custom_call.1} parent=1 // pred_region
      %s65 = ssub.s32 512, 512
      %66 = vsyncadd [#allocation9], %s65
      %s68 = sshll.u32 [#allocation8], 4
      %s69 = int_to_ptr.vmem [resolvable:$true] %s68
      %71 = dma.hbm_to_vmem [thread:$0]  %s8, 512, %s69, [#allocation9]
    $region37: #{tpu_custom_call.1} parent=1 // pred_fallthru
      _
    // Predicated region
    $region38: #{tpu_custom_call.1} parent=1 // pred_check
      _
    $region39: #{tpu_custom_call.1} parent=1 // pred_check_branch
      %73 = sbr.rel (0) target = $region41
    $region40: #{tpu_custom_call.1} parent=1 // pred_region
      %74 = dma.done [#allocation3], 128
    $region41: #{tpu_custom_call.1} parent=1 // pred_fallthru
      _
    // Predicated region
    $region42: #{tpu_custom_call.1} parent=1 // pred_check
      _
    $region43: #{tpu_custom_call.1} parent=1 // pred_check_branch
      %76 = sbr.rel (0) target = $region45
    $region44: #{tpu_custom_call.1} parent=1 // pred_region
      %77 = dma.done [#allocation6], 1024
    $region45: #{tpu_custom_call.1} parent=1 // pred_fallthru
      _
    // Predicated region
    $region46: #{tpu_custom_call.1} parent=1 // pred_check
      _
    $region47: #{tpu_custom_call.1} parent=1 // pred_check_branch
      %79 = sbr.rel (0) target = $region49
    $region48: #{tpu_custom_call.1} parent=1 // pred_region
      %80 = dma.done [#allocation6], 16384
    $region49: #{tpu_custom_call.1} parent=1 // pred_fallthru
      _
    // Predicated region
    $region50: #{tpu_custom_call.1} parent=1 // pred_check
      _
    $region51: #{tpu_custom_call.1} parent=1 // pred_check_branch
      %82 = sbr.rel (0) target = $region53
    $region52: #{tpu_custom_call.1} parent=1 // pred_region
      %83 = dma.done [#allocation9], 512
    $region53: #{tpu_custom_call.1} parent=1 // pred_fallthru
      _
    %v84 = vld [vmem:[#allocation2] sm:$0xff]
    %v85 = vld [vmem:[#allocation5] sm:$0xff]
    %v86 = vld [vmem:[#allocation5 + $0x8] sm:$0xff]
    %v87 = vld [vmem:[#allocation5 + $0x10] sm:$0xff]
    %v88 = vld [vmem:[#allocation5 + $0x18] sm:$0xff]
    %v89 = vld [vmem:[#allocation5 + $0x20] sm:$0x3f]
    %v90 = vld [vmem:[#allocation5 + $0x28] sm:$0x3f]
    %v91 = vld [vmem:[#allocation5 + $0x30] sm:$0x3f]
    %v92 = vld [vmem:[#allocation5 + $0x38] sm:$0x3f]
    %v93 = vld [vmem:[#allocation8] ss:$8 sm:$0xf]
    %v95 = vlaneseq
    %v96 = vshrl.u32 %v95, 7
    %v97 = vsub.s32 0, %v96
    %v98 = vrot.slane %v93, %v97
    %v99 = vlaneseq
    %v100 = vshrl.u32 %v99, 7
    %v101 = vsub.s32 1, %v100
    %v102 = vrot.slane %v93, %v101
    %v103 = vlaneseq
    %v104 = vshrl.u32 %v103, 7
    %v105 = vsub.s32 2, %v104
    %v106 = vrot.slane %v93, %v105
    %v107 = vlaneseq
    %v108 = vshrl.u32 %v107, 7
    %v109 = vsub.s32 3, %v108
    %v110 = vrot.slane %v93, %v109
    %vm115 = vcmask 113664
    %v117 = vsel %vm115, %v84, 0
    %vm119 = vcmask 1045504
    %v121 = vsel %vm119, %v89, 0
    %v124 = vsel %vm119, %v90, 0
    %v127 = vsel %vm119, %v91, 0
    %v130 = vsel %vm119, %v92, 0
    %132 = vmatprep.subr.mxu0 %v86
    %133 = vmatpush1.msra.mxu0 %v85
    %134 = vmatprep.subr.mxu0 %v124
    %135 = vmatpush1.msra.mxu0 %v121
    %136 = vmatprep.subr.mxu0 0.0
    %137 = vmatpush1.msra.mxu0 0.0
    %138 = vmatprep.subr.mxu0 0.0
    %139 = vmatpush1.msra.mxu0 0.0
    %140 = vmatprep.subr.mxu0 0.0
    %141 = vmatpush1.msra.mxu0 0.0
    %142 = vmatprep.subr.mxu0 0.0
    %143 = vmatpush1.msra.mxu0 0.0
    %144 = vmatprep.subr.mxu0 0.0
    %145 = vmatpush1.msra.mxu0 0.0
    %146 = vmatprep.subr.mxu0 0.0
    %147 = vmatpush1.msra.mxu0 0.0
    %148 = vmatprep.subr.mxu0 0.0
    %149 = vmatpush1.msra.mxu0 0.0
    %150 = vmatprep.subr.mxu0 0.0
    %151 = vmatpush1.msra.mxu0 0.0
    %152 = vmatprep.subr.mxu0 0.0
    %153 = vmatpush1.msra.mxu0 0.0
    %154 = vmatprep.subr.mxu0 0.0
    %155 = vmatpush1.msra.mxu0 0.0
    %156 = vmatprep.subr.mxu0 0.0
    %157 = vmatpush1.msra.mxu0 0.0
    %158 = vmatprep.subr.mxu0 0.0
    %159 = vmatpush1.msra.mxu0 0.0
    %160 = vmatprep.subr.mxu0 0.0
    %161 = vmatpush1.msra.mxu0 0.0
    %162 = vmatprep.subr.mxu0 0.0
    %163 = vmatpush1.msra.mxu0 0.0
    %164 = vmatprep.subr.mxu0 0.0
    %165 = vmatpush1.msra.mxu0 0.0
    %166 = vmatprep.subr.mxu0 0.0
    %167 = vmatpush1.msra.mxu0 0.0
    %168 = vmatprep.subr.mxu0 0.0
    %169 = vmatpush1.msra.mxu0 0.0
    %170 = vmatprep.subr.mxu0 0.0
    %171 = vmatpush1.msra.mxu0 0.0
    %172 = vmatprep.subr.mxu0 0.0
    %173 = vmatpush1.msra.mxu0 0.0
    %174 = vmatprep.subr.mxu0 0.0
    %175 = vmatpush1.msra.mxu0 0.0
    %176 = vmatprep.subr.mxu0 0.0
    %177 = vmatpush1.msra.mxu0 0.0
    %178 = vmatprep.subr.mxu0 0.0
    %179 = vmatpush1.msra.mxu0 0.0
    %180 = vmatprep.subr.mxu0 0.0
    %181 = vmatpush1.msra.mxu0 0.0
    %182 = vmatprep.subr.mxu0 0.0
    %183 = vmatpush1.msra.mxu0 0.0
    %184 = vmatprep.subr.mxu0 0.0
    %185 = vmatpush1.msra.mxu0 0.0
    %186 = vmatprep.subr.mxu0 0.0
    %187 = vmatpush1.msra.mxu0 0.0
    %188 = vmatprep.subr.mxu0 0.0
    %189 = vmatpush1.msra.mxu0 0.0
    %190 = vmatprep.subr.mxu0 0.0
    %191 = vmatpush1.msra.mxu0 0.0
    %192 = vmatprep.subr.mxu0 0.0
    %193 = vmatpush1.msra.mxu0 0.0
    %194 = vmatprep.subr.mxu0 0.0
    %195 = vmatpush1.msra.mxu0 0.0
    %196 = vmatprep.mubr.f32.mxu0 0.0
    %197 = vmatmul.mubr.f32.gmra.mrb[0].mxu0 %v117
    %v198 = vpop.f32.mrb[0].mxu0
    %v199 = vadd.f32 %v98, %v198
    %v200 = vpop.f32.mrb[0].mxu0
    %v201 = vadd.f32 %v102, %v200
    %202 = vdwg.mxu0
    %203 = vmatprep.subr.mxu0 %v88
    %204 = vmatpush1.msra.mxu0 %v87
    %205 = vmatprep.subr.mxu0 %v130
    %206 = vmatpush1.msra.mxu0 %v127
    %207 = vmatprep.subr.mxu0 0.0
    %208 = vmatpush1.msra.mxu0 0.0
    %209 = vmatprep.subr.mxu0 0.0
    %210 = vmatpush1.msra.mxu0 0.0
    %211 = vmatprep.subr.mxu0 0.0
    %212 = vmatpush1.msra.mxu0 0.0
    %213 = vmatprep.subr.mxu0 0.0
    %214 = vmatpush1.msra.mxu0 0.0
    %215 = vmatprep.subr.mxu0 0.0
    %216 = vmatpush1.msra.mxu0 0.0
    %217 = vmatprep.subr.mxu0 0.0
    %218 = vmatpush1.msra.mxu0 0.0
    %219 = vmatprep.subr.mxu0 0.0
    %220 = vmatpush1.msra.mxu0 0.0
    %221 = vmatprep.subr.mxu0 0.0
    %222 = vmatpush1.msra.mxu0 0.0
    %223 = vmatprep.subr.mxu0 0.0
    %224 = vmatpush1.msra.mxu0 0.0
    %225 = vmatprep.subr.mxu0 0.0
    %226 = vmatpush1.msra.mxu0 0.0
    %227 = vmatprep.subr.mxu0 0.0
    %228 = vmatpush1.msra.mxu0 0.0
    %229 = vmatprep.subr.mxu0 0.0
    %230 = vmatpush1.msra.mxu0 0.0
    %231 = vmatprep.subr.mxu0 0.0
    %232 = vmatpush1.msra.mxu0 0.0
    %233 = vmatprep.subr.mxu0 0.0
    %234 = vmatpush1.msra.mxu0 0.0
    %235 = vmatprep.subr.mxu0 0.0
    %236 = vmatpush1.msra.mxu0 0.0
    %237 = vmatprep.subr.mxu0 0.0
    %238 = vmatpush1.msra.mxu0 0.0
    %239 = vmatprep.subr.mxu0 0.0
    %240 = vmatpush1.msra.mxu0 0.0
    %241 = vmatprep.subr.mxu0 0.0
    %242 = vmatpush1.msra.mxu0 0.0
    %243 = vmatprep.subr.mxu0 0.0
    %244 = vmatpush1.msra.mxu0 0.0
    %245 = vmatprep.subr.mxu0 0.0
    %246 = vmatpush1.msra.mxu0 0.0
    %247 = vmatprep.subr.mxu0 0.0
    %248 = vmatpush1.msra.mxu0 0.0
    %249 = vmatprep.subr.mxu0 0.0
    %250 = vmatpush1.msra.mxu0 0.0
    %251 = vmatprep.subr.mxu0 0.0
    %252 = vmatpush1.msra.mxu0 0.0
    %253 = vmatprep.subr.mxu0 0.0
    %254 = vmatpush1.msra.mxu0 0.0
    %255 = vmatprep.subr.mxu0 0.0
    %256 = vmatpush1.msra.mxu0 0.0
    %257 = vmatprep.subr.mxu0 0.0
    %258 = vmatpush1.msra.mxu0 0.0
    %259 = vmatprep.subr.mxu0 0.0
    %260 = vmatpush1.msra.mxu0 0.0
    %261 = vmatprep.subr.mxu0 0.0
    %262 = vmatpush1.msra.mxu0 0.0
    %263 = vmatprep.subr.mxu0 0.0
    %264 = vmatpush1.msra.mxu0 0.0
    %265 = vmatprep.subr.mxu0 0.0
    %266 = vmatpush1.msra.mxu0 0.0
    %267 = vmatprep.mubr.f32.mxu0 0.0
    %268 = vmatmul.mubr.f32.gmra.mrb[0].mxu0 %v117
    %v269 = vpop.f32.mrb[0].mxu0
    %v270 = vadd.f32 %v106, %v269
    %v271 = vpop.f32.mrb[0].mxu0
    %v272 = vadd.f32 %v110, %v271
    %273 = vdwg.mxu0
    %v274 = vmax.f32 %v199, 0.0
    %v275 = vmax.f32 %v201, 0.0
    %v276 = vmax.f32 %v270, 0.0
    %v277 = vmax.f32 %v272, 0.0
    %v278 = vld [vmem:[#allocation7] sm:$0xff]
    %v279 = vld [vmem:[#allocation7 + $0x8] sm:$0xff]
    %v280 = vld [vmem:[#allocation7 + $0x10] sm:$0xff]
    %v281 = vld [vmem:[#allocation7 + $0x18] sm:$0xff]
    %v282 = vld [vmem:[#allocation7 + $0x20] sm:$0xff]
    %v283 = vld [vmem:[#allocation7 + $0x28] sm:$0xff]
    %v284 = vld [vmem:[#allocation7 + $0x30] sm:$0xff]
    %v285 = vld [vmem:[#allocation7 + $0x38] sm:$0xff]
    %v286 = vld [vmem:[#allocation7 + $0x40] sm:$0xff]
    %v287 = vld [vmem:[#allocation7 + $0x48] sm:$0xff]
    %v288 = vld [vmem:[#allocation7 + $0x50] sm:$0xff]
    %v289 = vld [vmem:[#allocation7 + $0x58] sm:$0xff]
    %v290 = vld [vmem:[#allocation7 + $0x60] sm:$0xff]
    %v291 = vld [vmem:[#allocation7 + $0x68] sm:$0xff]
    %v292 = vld [vmem:[#allocation7 + $0x70] sm:$0xff]
    %v293 = vld [vmem:[#allocation7 + $0x78] sm:$0xff]
    %v294 = vld [vmem:[#allocation7 + $0x80] sm:$0xff]
    %v295 = vld [vmem:[#allocation7 + $0x88] sm:$0xff]
    %v296 = vld [vmem:[#allocation7 + $0x90] sm:$0xff]
    %v297 = vld [vmem:[#allocation7 + $0x98] sm:$0xff]
    %v298 = vld [vmem:[#allocation7 + $0xa0] sm:$0xff]
    %v299 = vld [vmem:[#allocation7 + $0xa8] sm:$0xff]
    %v300 = vld [vmem:[#allocation7 + $0xb0] sm:$0xff]
    %v301 = vld [vmem:[#allocation7 + $0xb8] sm:$0xff]
    %v302 = vld [vmem:[#allocation7 + $0xc0] sm:$0xff]
    %v303 = vld [vmem:[#allocation7 + $0xc8] sm:$0xff]
    %v304 = vld [vmem:[#allocation7 + $0xd0] sm:$0xff]
    %v305 = vld [vmem:[#allocation7 + $0xd8] sm:$0xff]
    %v306 = vld [vmem:[#allocation7 + $0xe0] sm:$0xff]
    %v307 = vld [vmem:[#allocation7 + $0xe8] sm:$0xff]
    %v308 = vld [vmem:[#allocation7 + $0xf0] sm:$0xff]
    %v309 = vld [vmem:[#allocation7 + $0xf8] sm:$0xff]
    %v310 = vld [vmem:[#allocation7 + $0x100] sm:$0xff]
    %v311 = vld [vmem:[#allocation7 + $0x108] sm:$0xff]
    %v312 = vld [vmem:[#allocation7 + $0x110] sm:$0xff]
    %v313 = vld [vmem:[#allocation7 + $0x118] sm:$0xff]
    %v314 = vld [vmem:[#allocation7 + $0x120] sm:$0xff]
    %v315 = vld [vmem:[#allocation7 + $0x128] sm:$0xff]
    %v316 = vld [vmem:[#allocation7 + $0x130] sm:$0xff]
    %v317 = vld [vmem:[#allocation7 + $0x138] sm:$0xff]
    %v318 = vld [vmem:[#allocation7 + $0x140] sm:$0xff]
    %v319 = vld [vmem:[#allocation7 + $0x148] sm:$0xff]
    %v320 = vld [vmem:[#allocation7 + $0x150] sm:$0xff]
    %v321 = vld [vmem:[#allocation7 + $0x158] sm:$0xff]
    %v322 = vld [vmem:[#allocation7 + $0x160] sm:$0xff]
    %v323 = vld [vmem:[#allocation7 + $0x168] sm:$0xff]
    %v324 = vld [vmem:[#allocation7 + $0x170] sm:$0xff]
    %v325 = vld [vmem:[#allocation7 + $0x178] sm:$0xff]
    %v326 = vld [vmem:[#allocation7 + $0x180] sm:$0xff]
    %v327 = vld [vmem:[#allocation7 + $0x188] sm:$0xff]
    %v328 = vld [vmem:[#allocation7 + $0x190] sm:$0xff]
    %v329 = vld [vmem:[#allocation7 + $0x198] sm:$0xff]
    %v330 = vld [vmem:[#allocation7 + $0x1a0] sm:$0xff]
    %v331 = vld [vmem:[#allocation7 + $0x1a8] sm:$0xff]
    %v332 = vld [vmem:[#allocation7 + $0x1b0] sm:$0xff]
    %v333 = vld [vmem:[#allocation7 + $0x1b8] sm:$0xff]
    %v334 = vld [vmem:[#allocation7 + $0x1c0] sm:$0xff]
    %v335 = vld [vmem:[#allocation7 + $0x1c8] sm:$0xff]
    %v336 = vld [vmem:[#allocation7 + $0x1d0] sm:$0xff]
    %v337 = vld [vmem:[#allocation7 + $0x1d8] sm:$0xff]
    %v338 = vld [vmem:[#allocation7 + $0x1e0] sm:$0xff]
    %v339 = vld [vmem:[#allocation7 + $0x1e8] sm:$0xff]
    %v340 = vld [vmem:[#allocation7 + $0x1f0] sm:$0xff]
    %v341 = vld [vmem:[#allocation7 + $0x1f8] sm:$0xff]
    %v342 = vld [vmem:[#allocation7 + $0x200] sm:$0xff]
    %v343 = vld [vmem:[#allocation7 + $0x208] sm:$0xff]
    %v344 = vld [vmem:[#allocation7 + $0x210] sm:$0xff]
    %v345 = vld [vmem:[#allocation7 + $0x218] sm:$0xff]
    %v346 = vld [vmem:[#allocation7 + $0x220] sm:$0xff]
    %v347 = vld [vmem:[#allocation7 + $0x228] sm:$0xff]
    %v348 = vld [vmem:[#allocation7 + $0x230] sm:$0xff]
    %v349 = vld [vmem:[#allocation7 + $0x238] sm:$0xff]
    %v350 = vld [vmem:[#allocation7 + $0x240] sm:$0xff]
    %v351 = vld [vmem:[#allocation7 + $0x248] sm:$0xff]
    %v352 = vld [vmem:[#allocation7 + $0x250] sm:$0xff]
    %v353 = vld [vmem:[#allocation7 + $0x258] sm:$0xff]
    %v354 = vld [vmem:[#allocation7 + $0x260] sm:$0xff]
    %v355 = vld [vmem:[#allocation7 + $0x268] sm:$0xff]
    %v356 = vld [vmem:[#allocation7 + $0x270] sm:$0xff]
    %v357 = vld [vmem:[#allocation7 + $0x278] sm:$0xff]
    %v358 = vld [vmem:[#allocation7 + $0x280] sm:$0xff]
    %v359 = vld [vmem:[#allocation7 + $0x288] sm:$0xff]
    %v360 = vld [vmem:[#allocation7 + $0x290] sm:$0xff]
    %v361 = vld [vmem:[#allocation7 + $0x298] sm:$0xff]
    %v362 = vld [vmem:[#allocation7 + $0x2a0] sm:$0xff]
    %v363 = vld [vmem:[#allocation7 + $0x2a8] sm:$0xff]
    %v364 = vld [vmem:[#allocation7 + $0x2b0] sm:$0xff]
    %v365 = vld [vmem:[#allocation7 + $0x2b8] sm:$0xff]
    %v366 = vld [vmem:[#allocation7 + $0x2c0] sm:$0xff]
    %v367 = vld [vmem:[#allocation7 + $0x2c8] sm:$0xff]
    %v368 = vld [vmem:[#allocation7 + $0x2d0] sm:$0xff]
    %v369 = vld [vmem:[#allocation7 + $0x2d8] sm:$0xff]
    %v370 = vld [vmem:[#allocation7 + $0x2e0] sm:$0xff]
    %v371 = vld [vmem:[#allocation7 + $0x2e8] sm:$0xff]
    %v372 = vld [vmem:[#allocation7 + $0x2f0] sm:$0xff]
    %v373 = vld [vmem:[#allocation7 + $0x2f8] sm:$0xff]
    %v374 = vld [vmem:[#allocation7 + $0x300] sm:$0xff]
    %v375 = vld [vmem:[#allocation7 + $0x308] sm:$0xff]
    %v376 = vld [vmem:[#allocation7 + $0x310] sm:$0xff]
    %v377 = vld [vmem:[#allocation7 + $0x318] sm:$0xff]
    %v378 = vld [vmem:[#allocation7 + $0x320] sm:$0xff]
    %v379 = vld [vmem:[#allocation7 + $0x328] sm:$0xff]
    %v380 = vld [vmem:[#allocation7 + $0x330] sm:$0xff]
    %v381 = vld [vmem:[#allocation7 + $0x338] sm:$0xff]
    %v382 = vld [vmem:[#allocation7 + $0x340] sm:$0xff]
    %v383 = vld [vmem:[#allocation7 + $0x348] sm:$0xff]
    %v384 = vld [vmem:[#allocation7 + $0x350] sm:$0xff]
    %v385 = vld [vmem:[#allocation7 + $0x358] sm:$0xff]
    %v386 = vld [vmem:[#allocation7 + $0x360] sm:$0xff]
    %v387 = vld [vmem:[#allocation7 + $0x368] sm:$0xff]
    %v388 = vld [vmem:[#allocation7 + $0x370] sm:$0xff]
    %v389 = vld [vmem:[#allocation7 + $0x378] sm:$0xff]
    %v390 = vld [vmem:[#allocation7 + $0x380] sm:$0xff]
    %v391 = vld [vmem:[#allocation7 + $0x388] sm:$0xff]
    %v392 = vld [vmem:[#allocation7 + $0x390] sm:$0xff]
    %v393 = vld [vmem:[#allocation7 + $0x398] sm:$0xff]
    %v394 = vld [vmem:[#allocation7 + $0x3a0] sm:$0xff]
    %v395 = vld [vmem:[#allocation7 + $0x3a8] sm:$0xff]
    %v396 = vld [vmem:[#allocation7 + $0x3b0] sm:$0xff]
    %v397 = vld [vmem:[#allocation7 + $0x3b8] sm:$0xff]
    %v398 = vld [vmem:[#allocation7 + $0x3c0] sm:$0xff]
    %v399 = vld [vmem:[#allocation7 + $0x3c8] sm:$0xff]
    %v400 = vld [vmem:[#allocation7 + $0x3d0] sm:$0xff]
    %v401 = vld [vmem:[#allocation7 + $0x3d8] sm:$0xff]
    %v402 = vld [vmem:[#allocation7 + $0x3e0] sm:$0xff]
    %v403 = vld [vmem:[#allocation7 + $0x3e8] sm:$0xff]
    %v404 = vld [vmem:[#allocation7 + $0x3f0] sm:$0xff]
    %v405 = vld [vmem:[#allocation7 + $0x3f8] sm:$0xff]
    %s406 = scalar_lea.vmem [#allocation8], 1
    %v407 = vld [vmem:[%s406] ss:$8 sm:$0x3]
    %v409 = vlaneseq
    %v410 = vshrl.u32 %v409, 7
    %v411 = vsub.s32 0, %v410
    %v412 = vrot.slane %v407, %v411
    %v413 = vlaneseq
    %v414 = vshrl.u32 %v413, 7
    %v415 = vsub.s32 1, %v414
    %v416 = vrot.slane %v407, %v415
    %419 = vmatprep.subr.mxu0 %v279
    %420 = vmatpush1.msra.mxu0 %v278
    %421 = vmatprep.subr.mxu0 %v281
    %422 = vmatpush1.msra.mxu0 %v280
    %423 = vmatprep.subr.mxu0 %v283
    %424 = vmatpush1.msra.mxu0 %v282
    %425 = vmatprep.subr.mxu0 %v285
    %426 = vmatpush1.msra.mxu0 %v284
    %427 = vmatprep.subr.mxu0 %v287
    %428 = vmatpush1.msra.mxu0 %v286
    %429 = vmatprep.subr.mxu0 %v289
    %430 = vmatpush1.msra.mxu0 %v288
    %431 = vmatprep.subr.mxu0 %v291
    %432 = vmatpush1.msra.mxu0 %v290
    %433 = vmatprep.subr.mxu0 %v293
    %434 = vmatpush1.msra.mxu0 %v292
    %435 = vmatprep.subr.mxu0 %v295
    %436 = vmatpush1.msra.mxu0 %v294
    %437 = vmatprep.subr.mxu0 %v297
    %438 = vmatpush1.msra.mxu0 %v296
    %439 = vmatprep.subr.mxu0 %v299
    %440 = vmatpush1.msra.mxu0 %v298
    %441 = vmatprep.subr.mxu0 %v301
    %442 = vmatpush1.msra.mxu0 %v300
    %443 = vmatprep.subr.mxu0 %v303
    %444 = vmatpush1.msra.mxu0 %v302
    %445 = vmatprep.subr.mxu0 %v305
    %446 = vmatpush1.msra.mxu0 %v304
    %447 = vmatprep.subr.mxu0 %v307
    %448 = vmatpush1.msra.mxu0 %v306
    %449 = vmatprep.subr.mxu0 %v309
    %450 = vmatpush1.msra.mxu0 %v308
    %451 = vmatprep.subr.mxu0 %v311
    %452 = vmatpush1.msra.mxu0 %v310
    %453 = vmatprep.subr.mxu0 %v313
    %454 = vmatpush1.msra.mxu0 %v312
    %455 = vmatprep.subr.mxu0 %v315
    %456 = vmatpush1.msra.mxu0 %v314
    %457 = vmatprep.subr.mxu0 %v317
    %458 = vmatpush1.msra.mxu0 %v316
    %459 = vmatprep.subr.mxu0 %v319
    %460 = vmatpush1.msra.mxu0 %v318
    %461 = vmatprep.subr.mxu0 %v321
    %462 = vmatpush1.msra.mxu0 %v320
    %463 = vmatprep.subr.mxu0 %v323
    %464 = vmatpush1.msra.mxu0 %v322
    %465 = vmatprep.subr.mxu0 %v325
    %466 = vmatpush1.msra.mxu0 %v324
    %467 = vmatprep.subr.mxu0 %v327
    %468 = vmatpush1.msra.mxu0 %v326
    %469 = vmatprep.subr.mxu0 %v329
    %470 = vmatpush1.msra.mxu0 %v328
    %471 = vmatprep.subr.mxu0 %v331
    %472 = vmatpush1.msra.mxu0 %v330
    %473 = vmatprep.subr.mxu0 %v333
    %474 = vmatpush1.msra.mxu0 %v332
    %475 = vmatprep.subr.mxu0 %v335
    %476 = vmatpush1.msra.mxu0 %v334
    %477 = vmatprep.subr.mxu0 %v337
    %478 = vmatpush1.msra.mxu0 %v336
    %479 = vmatprep.subr.mxu0 %v339
    %480 = vmatpush1.msra.mxu0 %v338
    %481 = vmatprep.subr.mxu0 %v341
    %482 = vmatpush1.msra.mxu0 %v340
    %483 = vmatprep.mubr.f32.mxu0 %v275
    %484 = vmatmul.mubr.f32.gmra.mrb[0].mxu0 %v274
    %v485 = vpop.f32.mrb[0].mxu0
    %v486 = vadd.f32 %v412, %v485
    %v487 = vpop.f32.mrb[0].mxu0
    %v488 = vadd.f32 %v416, %v487
    %489 = vdwg.mxu0
    %490 = vmatprep.subr.mxu0 %v343
    %491 = vmatpush1.msra.mxu0 %v342
    %492 = vmatprep.subr.mxu0 %v345
    %493 = vmatpush1.msra.mxu0 %v344
    %494 = vmatprep.subr.mxu0 %v347
    %495 = vmatpush1.msra.mxu0 %v346
    %496 = vmatprep.subr.mxu0 %v349
    %497 = vmatpush1.msra.mxu0 %v348
    %498 = vmatprep.subr.mxu0 %v351
    %499 = vmatpush1.msra.mxu0 %v350
    %500 = vmatprep.subr.mxu0 %v353
    %501 = vmatpush1.msra.mxu0 %v352
    %502 = vmatprep.subr.mxu0 %v355
    %503 = vmatpush1.msra.mxu0 %v354
    %504 = vmatprep.subr.mxu0 %v357
    %505 = vmatpush1.msra.mxu0 %v356
    %506 = vmatprep.subr.mxu0 %v359
    %507 = vmatpush1.msra.mxu0 %v358
    %508 = vmatprep.subr.mxu0 %v361
    %509 = vmatpush1.msra.mxu0 %v360
    %510 = vmatprep.subr.mxu0 %v363
    %511 = vmatpush1.msra.mxu0 %v362
    %512 = vmatprep.subr.mxu0 %v365
    %513 = vmatpush1.msra.mxu0 %v364
    %514 = vmatprep.subr.mxu0 %v367
    %515 = vmatpush1.msra.mxu0 %v366
    %516 = vmatprep.subr.mxu0 %v369
    %517 = vmatpush1.msra.mxu0 %v368
    %518 = vmatprep.subr.mxu0 %v371
    %519 = vmatpush1.msra.mxu0 %v370
    %520 = vmatprep.subr.mxu0 %v373
    %521 = vmatpush1.msra.mxu0 %v372
    %522 = vmatprep.subr.mxu0 %v375
    %523 = vmatpush1.msra.mxu0 %v374
    %524 = vmatprep.subr.mxu0 %v377
    %525 = vmatpush1.msra.mxu0 %v376
    %526 = vmatprep.subr.mxu0 %v379
    %527 = vmatpush1.msra.mxu0 %v378
    %528 = vmatprep.subr.mxu0 %v381
    %529 = vmatpush1.msra.mxu0 %v380
    %530 = vmatprep.subr.mxu0 %v383
    %531 = vmatpush1.msra.mxu0 %v382
    %532 = vmatprep.subr.mxu0 %v385
    %533 = vmatpush1.msra.mxu0 %v384
    %534 = vmatprep.subr.mxu0 %v387
    %535 = vmatpush1.msra.mxu0 %v386
    %536 = vmatprep.subr.mxu0 %v389
    %537 = vmatpush1.msra.mxu0 %v388
    %538 = vmatprep.subr.mxu0 %v391
    %539 = vmatpush1.msra.mxu0 %v390
    %540 = vmatprep.subr.mxu0 %v393
    %541 = vmatpush1.msra.mxu0 %v392
    %542 = vmatprep.subr.mxu0 %v395
    %543 = vmatpush1.msra.mxu0 %v394
    %544 = vmatprep.subr.mxu0 %v397
    %545 = vmatpush1.msra.mxu0 %v396
    %546 = vmatprep.subr.mxu0 %v399
    %547 = vmatpush1.msra.mxu0 %v398
    %548 = vmatprep.subr.mxu0 %v401
    %549 = vmatpush1.msra.mxu0 %v400
    %550 = vmatprep.subr.mxu0 %v403
    %551 = vmatpush1.msra.mxu0 %v402
    %552 = vmatprep.subr.mxu0 %v405
    %553 = vmatpush1.msra.mxu0 %v404
    %554 = vmatprep.mubr.f32.mxu0 %v277
    %555 = vmatmul.mubr.f32.gmra.mrb[0].mxu0 %v276
    %v556 = vpop.f32.mrb[0].mxu0
    %v557 = vadd.f32 %v486, %v556
    %v558 = vpop.f32.mrb[0].mxu0
    %v559 = vadd.f32 %v488, %v558
    %560 = vdwg.mxu0
    %v561 = vmax.f32 %v557, 0.0
    %v562 = vmax.f32 %v559, 0.0
    %v563 = vld [vmem:[%s3] sm:$0xff]
    %v564 = vld [vmem:[%s3 + $0x8] sm:$0xff]
    %v565 = vld [vmem:[%s3 + $0x10] sm:$0xff]
    %v566 = vld [vmem:[%s3 + $0x18] sm:$0xff]
    %v567 = vld [vmem:[%s3 + $0x20] sm:$0xff]
    %v568 = vld [vmem:[%s3 + $0x28] sm:$0xff]
    %v569 = vld [vmem:[%s3 + $0x30] sm:$0xff]
    %v570 = vld [vmem:[%s3 + $0x38] sm:$0xff]
    %v571 = vld [vmem:[%s3 + $0x40] sm:$0xff]
    %v572 = vld [vmem:[%s3 + $0x48] sm:$0xff]
    %v573 = vld [vmem:[%s3 + $0x50] sm:$0xff]
    %v574 = vld [vmem:[%s3 + $0x58] sm:$0xff]
    %v575 = vld [vmem:[%s3 + $0x60] sm:$0xff]
    %v576 = vld [vmem:[%s3 + $0x68] sm:$0xff]
    %v577 = vld [vmem:[%s3 + $0x70] sm:$0xff]
    %v578 = vld [vmem:[%s3 + $0x78] sm:$0xff]
    %v579 = vld [vmem:[%s3 + $0x80] sm:$0xff]
    %v580 = vld [vmem:[%s3 + $0x88] sm:$0xff]
    %v581 = vld [vmem:[%s3 + $0x90] sm:$0xff]
    %v582 = vld [vmem:[%s3 + $0x98] sm:$0xff]
    %v583 = vld [vmem:[%s3 + $0xa0] sm:$0xff]
    %v584 = vld [vmem:[%s3 + $0xa8] sm:$0xff]
    %v585 = vld [vmem:[%s3 + $0xb0] sm:$0xff]
    %v586 = vld [vmem:[%s3 + $0xb8] sm:$0xff]
    %v587 = vld [vmem:[%s3 + $0xc0] sm:$0xff]
    %v588 = vld [vmem:[%s3 + $0xc8] sm:$0xff]
    %v589 = vld [vmem:[%s3 + $0xd0] sm:$0xff]
    %v590 = vld [vmem:[%s3 + $0xd8] sm:$0xff]
    %v591 = vld [vmem:[%s3 + $0xe0] sm:$0xff]
    %v592 = vld [vmem:[%s3 + $0xe8] sm:$0xff]
    %v593 = vld [vmem:[%s3 + $0xf0] sm:$0xff]
    %v594 = vld [vmem:[%s3 + $0xf8] sm:$0xff]
    %v595 = vld [vmem:[#allocation8 + $0x2] ss:$0 sm:$0xff]
    %596 = vmatprep.subr.mxu0 0.0
    %597 = vmatpush1.msra.mxu0 %v563
    %598 = vmatprep.subr.mxu0 0.0
    %599 = vmatpush1.msra.mxu0 %v564
    %600 = vmatprep.subr.mxu0 0.0
    %601 = vmatpush1.msra.mxu0 %v565
    %602 = vmatprep.subr.mxu0 0.0
    %603 = vmatpush1.msra.mxu0 %v566
    %604 = vmatprep.subr.mxu0 0.0
    %605 = vmatpush1.msra.mxu0 %v567
    %606 = vmatprep.subr.mxu0 0.0
    %607 = vmatpush1.msra.mxu0 %v568
    %608 = vmatprep.subr.mxu0 0.0
    %609 = vmatpush1.msra.mxu0 %v569
    %610 = vmatprep.subr.mxu0 0.0
    %611 = vmatpush1.msra.mxu0 %v570
    %612 = vmatprep.subr.mxu0 0.0
    %613 = vmatpush1.msra.mxu0 %v571
    %614 = vmatprep.subr.mxu0 0.0
    %615 = vmatpush1.msra.mxu0 %v572
    %616 = vmatprep.subr.mxu0 0.0
    %617 = vmatpush1.msra.mxu0 %v573
    %618 = vmatprep.subr.mxu0 0.0
    %619 = vmatpush1.msra.mxu0 %v574
    %620 = vmatprep.subr.mxu0 0.0
    %621 = vmatpush1.msra.mxu0 %v575
    %622 = vmatprep.subr.mxu0 0.0
    %623 = vmatpush1.msra.mxu0 %v576
    %624 = vmatprep.subr.mxu0 0.0
    %625 = vmatpush1.msra.mxu0 %v577
    %626 = vmatprep.subr.mxu0 0.0
    %627 = vmatpush1.msra.mxu0 %v578
    %628 = vmatprep.subr.mxu0 0.0
    %629 = vmatpush1.msra.mxu0 %v579
    %630 = vmatprep.subr.mxu0 0.0
    %631 = vmatpush1.msra.mxu0 %v580
    %632 = vmatprep.subr.mxu0 0.0
    %633 = vmatpush1.msra.mxu0 %v581
    %634 = vmatprep.subr.mxu0 0.0
    %635 = vmatpush1.msra.mxu0 %v582
    %636 = vmatprep.subr.mxu0 0.0
    %637 = vmatpush1.msra.mxu0 %v583
    %638 = vmatprep.subr.mxu0 0.0
    %639 = vmatpush1.msra.mxu0 %v584
    %640 = vmatprep.subr.mxu0 0.0
    %641 = vmatpush1.msra.mxu0 %v585
    %642 = vmatprep.subr.mxu0 0.0
    %643 = vmatpush1.msra.mxu0 %v586
    %644 = vmatprep.subr.mxu0 0.0
    %645 = vmatpush1.msra.mxu0 %v587
    %646 = vmatprep.subr.mxu0 0.0
    %647 = vmatpush1.msra.mxu0 %v588
    %648 = vmatprep.subr.mxu0 0.0
    %649 = vmatpush1.msra.mxu0 %v589
    %650 = vmatprep.subr.mxu0 0.0
    %651 = vmatpush1.msra.mxu0 %v590
    %652 = vmatprep.subr.mxu0 0.0
    %653 = vmatpush1.msra.mxu0 %v591
    %654 = vmatprep.subr.mxu0 0.0
    %655 = vmatpush1.msra.mxu0 %v592
    %656 = vmatprep.subr.mxu0 0.0
    %657 = vmatpush1.msra.mxu0 %v593
    %658 = vmatprep.subr.mxu0 0.0
    %659 = vmatpush1.msra.mxu0 %v594
    %660 = vmatprep.mubr.f32.mxu0 %v562
    %661 = vmatmul.mubr.f32.gmra.mrb[0].mxu0 %v561
    %v662 = vpop.f32.mrb[0].mxu0
    %v663 = vadd.f32 %v595, %v662
    %v664 = vpop.f32.mrb[0].mxu0
    %665 = vdwg.mxu0
    %v666 = vmax.f32 %v663, 0.0
    %v667 = vld [vmem:[%s4] sm:$0xff]
    %v668 = vld [vmem:[%s4 + $0x8] sm:$0xff]
    %v669 = vld [vmem:[%s4 + $0x10] sm:$0xff]
    %v670 = vld [vmem:[%s4 + $0x18] sm:$0xff]
    %v671 = vld [vmem:[%s4 + $0x20] sm:$0xff]
    %v672 = vld [vmem:[%s4 + $0x28] sm:$0xff]
    %v673 = vld [vmem:[%s4 + $0x30] sm:$0xff]
    %v674 = vld [vmem:[%s4 + $0x38] sm:$0xff]
    %v675 = vld [vmem:[%s4 + $0x40] sm:$0xff]
    %v676 = vld [vmem:[%s4 + $0x48] sm:$0xff]
    %v677 = vld [vmem:[%s4 + $0x50] sm:$0xff]
    %v678 = vld [vmem:[%s4 + $0x58] sm:$0xff]
    %v679 = vld [vmem:[%s4 + $0x60] sm:$0xff]
    %v680 = vld [vmem:[%s4 + $0x68] sm:$0xff]
    %v681 = vld [vmem:[%s4 + $0x70] sm:$0xff]
    %v682 = vld [vmem:[%s4 + $0x78] sm:$0xff]
    %v683 = vld [vmem:[#allocation8 + $0x3] ss:$0 sm:$0xff]
    %684 = vmatprep.subr.mxu0 0.0
    %685 = vmatpush1.msra.mxu0 %v667
    %686 = vmatprep.subr.mxu0 0.0
    %687 = vmatpush1.msra.mxu0 %v668
    %688 = vmatprep.subr.mxu0 0.0
    %689 = vmatpush1.msra.mxu0 %v669
    %690 = vmatprep.subr.mxu0 0.0
    %691 = vmatpush1.msra.mxu0 %v670
    %692 = vmatprep.subr.mxu0 0.0
    %693 = vmatpush1.msra.mxu0 %v671
    %694 = vmatprep.subr.mxu0 0.0
    %695 = vmatpush1.msra.mxu0 %v672
    %696 = vmatprep.subr.mxu0 0.0
    %697 = vmatpush1.msra.mxu0 %v673
    %698 = vmatprep.subr.mxu0 0.0
    %699 = vmatpush1.msra.mxu0 %v674
    %700 = vmatprep.subr.mxu0 0.0
    %701 = vmatpush1.msra.mxu0 %v675
    %702 = vmatprep.subr.mxu0 0.0
    %703 = vmatpush1.msra.mxu0 %v676
    %704 = vmatprep.subr.mxu0 0.0
    %705 = vmatpush1.msra.mxu0 %v677
    %706 = vmatprep.subr.mxu0 0.0
    %707 = vmatpush1.msra.mxu0 %v678
    %708 = vmatprep.subr.mxu0 0.0
    %709 = vmatpush1.msra.mxu0 %v679
    %710 = vmatprep.subr.mxu0 0.0
    %711 = vmatpush1.msra.mxu0 %v680
    %712 = vmatprep.subr.mxu0 0.0
    %713 = vmatpush1.msra.mxu0 %v681
    %714 = vmatprep.subr.mxu0 0.0
    %715 = vmatpush1.msra.mxu0 %v682
    %716 = vmatprep.subr.mxu0 0.0
    %717 = vmatpush1.msra.mxu0 0.0
    %718 = vmatprep.subr.mxu0 0.0
    %719 = vmatpush1.msra.mxu0 0.0
    %720 = vmatprep.subr.mxu0 0.0
    %721 = vmatpush1.msra.mxu0 0.0
    %722 = vmatprep.subr.mxu0 0.0
    %723 = vmatpush1.msra.mxu0 0.0
    %724 = vmatprep.subr.mxu0 0.0
    %725 = vmatpush1.msra.mxu0 0.0
    %726 = vmatprep.subr.mxu0 0.0
    %727 = vmatpush1.msra.mxu0 0.0
    %728 = vmatprep.subr.mxu0 0.0
    %729 = vmatpush1.msra.mxu0 0.0
    %730 = vmatprep.subr.mxu0 0.0
    %731 = vmatpush1.msra.mxu0 0.0
    %732 = vmatprep.subr.mxu0 0.0
    %733 = vmatpush1.msra.mxu0 0.0
    %734 = vmatprep.subr.mxu0 0.0
    %735 = vmatpush1.msra.mxu0 0.0
    %736 = vmatprep.subr.mxu0 0.0
    %737 = vmatpush1.msra.mxu0 0.0
    %738 = vmatprep.subr.mxu0 0.0
    %739 = vmatpush1.msra.mxu0 0.0
    %740 = vmatprep.subr.mxu0 0.0
    %741 = vmatpush1.msra.mxu0 0.0
    %742 = vmatprep.subr.mxu0 0.0
    %743 = vmatpush1.msra.mxu0 0.0
    %744 = vmatprep.subr.mxu0 0.0
    %745 = vmatpush1.msra.mxu0 0.0
    %746 = vmatprep.subr.mxu0 0.0
    %747 = vmatpush1.msra.mxu0 0.0
    %748 = vmatprep.mubr.f32.mxu0 0.0
    %749 = vmatmul.mubr.f32.gmra.mrb[0].mxu0 %v666
    %v750 = vpop.f32.mrb[0].mxu0
    %v751 = vadd.f32 %v683, %v750
    %v752 = vpop.f32.mrb[0].mxu0
    %753 = vdwg.mxu0
    %v754 = vmax.f32 %v751, 0.0
    %v755 = vld [vmem:[%s5] sm:$0xff]
    %v756 = vld [vmem:[%s5 + $0x8] sm:$0xff]
    %v757 = vld [vmem:[%s5 + $0x10] sm:$0xff]
    %v758 = vld [vmem:[%s5 + $0x18] sm:$0xff]
    %v759 = vld [vmem:[%s5 + $0x20] sm:$0xff]
    %v760 = vld [vmem:[%s5 + $0x28] sm:$0xff]
    %v761 = vld [vmem:[%s5 + $0x30] sm:$0xff]
    %v762 = vld [vmem:[%s5 + $0x38] sm:$0xff]
    %v763 = vld [vmem:[#allocation8 + $0x4] ss:$0 sm:$0xff]
    %vm764 = vcmask 523264
    %v766 = vsel %vm764, %v754, 0
    %768 = vmatprep.subr.mxu0 0.0
    %769 = vmatpush1.msra.mxu0 %v755
    %770 = vmatprep.subr.mxu0 0.0
    %771 = vmatpush1.msra.mxu0 %v756
    %772 = vmatprep.subr.mxu0 0.0
    %773 = vmatpush1.msra.mxu0 %v757
    %774 = vmatprep.subr.mxu0 0.0
    %775 = vmatpush1.msra.mxu0 %v758
    %776 = vmatprep.subr.mxu0 0.0
    %777 = vmatpush1.msra.mxu0 %v759
    %778 = vmatprep.subr.mxu0 0.0
    %779 = vmatpush1.msra.mxu0 %v760
    %780 = vmatprep.subr.mxu0 0.0
    %781 = vmatpush1.msra.mxu0 %v761
    %782 = vmatprep.subr.mxu0 0.0
    %783 = vmatpush1.msra.mxu0 %v762
    %784 = vmatprep.subr.mxu0 0.0
    %785 = vmatpush1.msra.mxu0 0.0
    %786 = vmatprep.subr.mxu0 0.0
    %787 = vmatpush1.msra.mxu0 0.0
    %788 = vmatprep.subr.mxu0 0.0
    %789 = vmatpush1.msra.mxu0 0.0
    %790 = vmatprep.subr.mxu0 0.0
    %791 = vmatpush1.msra.mxu0 0.0
    %792 = vmatprep.subr.mxu0 0.0
    %793 = vmatpush1.msra.mxu0 0.0
    %794 = vmatprep.subr.mxu0 0.0
    %795 = vmatpush1.msra.mxu0 0.0
    %796 = vmatprep.subr.mxu0 0.0
    %797 = vmatpush1.msra.mxu0 0.0
    %798 = vmatprep.subr.mxu0 0.0
    %799 = vmatpush1.msra.mxu0 0.0
    %800 = vmatprep.subr.mxu0 0.0
    %801 = vmatpush1.msra.mxu0 0.0
    %802 = vmatprep.subr.mxu0 0.0
    %803 = vmatpush1.msra.mxu0 0.0
    %804 = vmatprep.subr.mxu0 0.0
    %805 = vmatpush1.msra.mxu0 0.0
    %806 = vmatprep.subr.mxu0 0.0
    %807 = vmatpush1.msra.mxu0 0.0
    %808 = vmatprep.subr.mxu0 0.0
    %809 = vmatpush1.msra.mxu0 0.0
    %810 = vmatprep.subr.mxu0 0.0
    %811 = vmatpush1.msra.mxu0 0.0
    %812 = vmatprep.subr.mxu0 0.0
    %813 = vmatpush1.msra.mxu0 0.0
    %814 = vmatprep.subr.mxu0 0.0
    %815 = vmatpush1.msra.mxu0 0.0
    %816 = vmatprep.subr.mxu0 0.0
    %817 = vmatpush1.msra.mxu0 0.0
    %818 = vmatprep.subr.mxu0 0.0
    %819 = vmatpush1.msra.mxu0 0.0
    %820 = vmatprep.subr.mxu0 0.0
    %821 = vmatpush1.msra.mxu0 0.0
    %822 = vmatprep.subr.mxu0 0.0
    %823 = vmatpush1.msra.mxu0 0.0
    %824 = vmatprep.subr.mxu0 0.0
    %825 = vmatpush1.msra.mxu0 0.0
    %826 = vmatprep.subr.mxu0 0.0
    %827 = vmatpush1.msra.mxu0 0.0
    %828 = vmatprep.subr.mxu0 0.0
    %829 = vmatpush1.msra.mxu0 0.0
    %830 = vmatprep.subr.mxu0 0.0
    %831 = vmatpush1.msra.mxu0 0.0
    %832 = vmatprep.mubr.f32.mxu0 0.0
    %833 = vmatmul.mubr.f32.gmra.mrb[0].mxu0 %v766
    %v834 = vpop.f32.mrb[0].mxu0
    %v835 = vadd.f32 %v763, %v834
    %v836 = vpop.f32.mrb[0].mxu0
    %837 = vdwg.mxu0
    %v838 = vmax.f32 %v835, 0.0
    %v839 = vld [vmem:[%s6] sm:$0xff]
    %v840 = vld [vmem:[%s6 + $0x8] sm:$0xff]
    %v841 = vld [vmem:[%s6 + $0x10] sm:$0xff]
    %v842 = vld [vmem:[%s6 + $0x18] sm:$0xff]
    %v843 = vld [vmem:[#allocation8 + $0x5] ss:$0 sm:$0xff]
    %vm844 = vcmask 261120
    %v846 = vsel %vm844, %v838, 0
    %848 = vmatprep.subr.mxu0 0.0
    %849 = vmatpush1.msra.mxu0 %v839
    %850 = vmatprep.subr.mxu0 0.0
    %851 = vmatpush1.msra.mxu0 %v840
    %852 = vmatprep.subr.mxu0 0.0
    %853 = vmatpush1.msra.mxu0 %v841
    %854 = vmatprep.subr.mxu0 0.0
    %855 = vmatpush1.msra.mxu0 %v842
    %856 = vmatprep.subr.mxu0 0.0
    %857 = vmatpush1.msra.mxu0 0.0
    %858 = vmatprep.subr.mxu0 0.0
    %859 = vmatpush1.msra.mxu0 0.0
    %860 = vmatprep.subr.mxu0 0.0
    %861 = vmatpush1.msra.mxu0 0.0
    %862 = vmatprep.subr.mxu0 0.0
    %863 = vmatpush1.msra.mxu0 0.0
    %864 = vmatprep.subr.mxu0 0.0
    %865 = vmatpush1.msra.mxu0 0.0
    %866 = vmatprep.subr.mxu0 0.0
    %867 = vmatpush1.msra.mxu0 0.0
    %868 = vmatprep.subr.mxu0 0.0
    %869 = vmatpush1.msra.mxu0 0.0
    %870 = vmatprep.subr.mxu0 0.0
    %871 = vmatpush1.msra.mxu0 0.0
    %872 = vmatprep.subr.mxu0 0.0
    %873 = vmatpush1.msra.mxu0 0.0
    %874 = vmatprep.subr.mxu0 0.0
    %875 = vmatpush1.msra.mxu0 0.0
    %876 = vmatprep.subr.mxu0 0.0
    %877 = vmatpush1.msra.mxu0 0.0
    %878 = vmatprep.subr.mxu0 0.0
    %879 = vmatpush1.msra.mxu0 0.0
    %880 = vmatprep.subr.mxu0 0.0
    %881 = vmatpush1.msra.mxu0 0.0
    %882 = vmatprep.subr.mxu0 0.0
    %883 = vmatpush1.msra.mxu0 0.0
    %884 = vmatprep.subr.mxu0 0.0
    %885 = vmatpush1.msra.mxu0 0.0
    %886 = vmatprep.subr.mxu0 0.0
    %887 = vmatpush1.msra.mxu0 0.0
    %888 = vmatprep.subr.mxu0 0.0
    %889 = vmatpush1.msra.mxu0 0.0
    %890 = vmatprep.subr.mxu0 0.0
    %891 = vmatpush1.msra.mxu0 0.0
    %892 = vmatprep.subr.mxu0 0.0
    %893 = vmatpush1.msra.mxu0 0.0
    %894 = vmatprep.subr.mxu0 0.0
    %895 = vmatpush1.msra.mxu0 0.0
    %896 = vmatprep.subr.mxu0 0.0
    %897 = vmatpush1.msra.mxu0 0.0
    %898 = vmatprep.subr.mxu0 0.0
    %899 = vmatpush1.msra.mxu0 0.0
    %900 = vmatprep.subr.mxu0 0.0
    %901 = vmatpush1.msra.mxu0 0.0
    %902 = vmatprep.subr.mxu0 0.0
    %903 = vmatpush1.msra.mxu0 0.0
    %904 = vmatprep.subr.mxu0 0.0
    %905 = vmatpush1.msra.mxu0 0.0
    %906 = vmatprep.subr.mxu0 0.0
    %907 = vmatpush1.msra.mxu0 0.0
    %908 = vmatprep.subr.mxu0 0.0
    %909 = vmatpush1.msra.mxu0 0.0
    %910 = vmatprep.subr.mxu0 0.0
    %911 = vmatpush1.msra.mxu0 0.0
    %912 = vmatprep.mubr.f32.mxu0 0.0
    %913 = vmatmul.mubr.f32.gmra.mrb[0].mxu0 %v846
    %v914 = vpop.f32.mrb[0].mxu0
    %v915 = vadd.f32 %v843, %v914
    %v916 = vpop.f32.mrb[0].mxu0
    %917 = vdwg.mxu0
    %v918 = vmax.f32 %v915, 0.0
    %v919 = vld [vmem:[%s7] sm:$0xff]
    %v920 = vld [vmem:[%s7 + $0x8] sm:$0xff]
    %v921 = vld [vmem:[#allocation8 + $0x6] ss:$0 sm:$0xff]
    %vm922 = vcmask 130048
    %v924 = vsel %vm922, %v918, 0
    %926 = vmatprep.subr.mxu0 0.0
    %927 = vmatpush1.msra.mxu0 %v919
    %928 = vmatprep.subr.mxu0 0.0
    %929 = vmatpush1.msra.mxu0 %v920
    %930 = vmatprep.subr.mxu0 0.0
    %931 = vmatpush1.msra.mxu0 0.0
    %932 = vmatprep.subr.mxu0 0.0
    %933 = vmatpush1.msra.mxu0 0.0
    %934 = vmatprep.subr.mxu0 0.0
    %935 = vmatpush1.msra.mxu0 0.0
    %936 = vmatprep.subr.mxu0 0.0
    %937 = vmatpush1.msra.mxu0 0.0
    %938 = vmatprep.subr.mxu0 0.0
    %939 = vmatpush1.msra.mxu0 0.0
    %940 = vmatprep.subr.mxu0 0.0
    %941 = vmatpush1.msra.mxu0 0.0
    %942 = vmatprep.subr.mxu0 0.0
    %943 = vmatpush1.msra.mxu0 0.0
    %944 = vmatprep.subr.mxu0 0.0
    %945 = vmatpush1.msra.mxu0 0.0
    %946 = vmatprep.subr.mxu0 0.0
    %947 = vmatpush1.msra.mxu0 0.0
    %948 = vmatprep.subr.mxu0 0.0
    %949 = vmatpush1.msra.mxu0 0.0
    %950 = vmatprep.subr.mxu0 0.0
    %951 = vmatpush1.msra.mxu0 0.0
    %952 = vmatprep.subr.mxu0 0.0
    %953 = vmatpush1.msra.mxu0 0.0
    %954 = vmatprep.subr.mxu0 0.0
    %955 = vmatpush1.msra.mxu0 0.0
    %956 = vmatprep.subr.mxu0 0.0
    %957 = vmatpush1.msra.mxu0 0.0
    %958 = vmatprep.subr.mxu0 0.0
    %959 = vmatpush1.msra.mxu0 0.0
    %960 = vmatprep.subr.mxu0 0.0
    %961 = vmatpush1.msra.mxu0 0.0
    %962 = vmatprep.subr.mxu0 0.0
    %963 = vmatpush1.msra.mxu0 0.0
    %964 = vmatprep.subr.mxu0 0.0
    %965 = vmatpush1.msra.mxu0 0.0
    %966 = vmatprep.subr.mxu0 0.0
    %967 = vmatpush1.msra.mxu0 0.0
    %968 = vmatprep.subr.mxu0 0.0
    %969 = vmatpush1.msra.mxu0 0.0
    %970 = vmatprep.subr.mxu0 0.0
    %971 = vmatpush1.msra.mxu0 0.0
    %972 = vmatprep.subr.mxu0 0.0
    %973 = vmatpush1.msra.mxu0 0.0
    %974 = vmatprep.subr.mxu0 0.0
    %975 = vmatpush1.msra.mxu0 0.0
    %976 = vmatprep.subr.mxu0 0.0
    %977 = vmatpush1.msra.mxu0 0.0
    %978 = vmatprep.subr.mxu0 0.0
    %979 = vmatpush1.msra.mxu0 0.0
    %980 = vmatprep.subr.mxu0 0.0
    %981 = vmatpush1.msra.mxu0 0.0
    %982 = vmatprep.subr.mxu0 0.0
    %983 = vmatpush1.msra.mxu0 0.0
    %984 = vmatprep.subr.mxu0 0.0
    %985 = vmatpush1.msra.mxu0 0.0
    %986 = vmatprep.subr.mxu0 0.0
    %987 = vmatpush1.msra.mxu0 0.0
    %988 = vmatprep.subr.mxu0 0.0
    %989 = vmatpush1.msra.mxu0 0.0
    %990 = vmatprep.mubr.f32.mxu0 0.0
    %991 = vmatmul.mubr.f32.gmra.mrb[0].mxu0 %v924
    %v992 = vpop.f32.mrb[0].mxu0
    %v993 = vadd.f32 %v921, %v992
    %v994 = vpop.f32.mrb[0].mxu0
    %995 = vdwg.mxu0
    %997 = vset.pattern.permute.xlu0 0
    %998 = vperm.xlu0 %997, %v993
    %v999 = vpop.permute.xlu0 %998
    %v1000 = vlaneseq
    %v1001 = vand.u32 %v1000, 127
    %v1002 = vlaneseq
    %v1003 = vshrl.u32 %v1002, 7
    %v1004 = vsub.s32 %v1001, %v1003
    %v1005 = vrot.slane %v999, %v1004
    %vm1007 = vcmask 57344
    %1008 = vst.msk [vmem:[#allocation10] sm:$0x1] %vm1007, %v1005
    // Predicated region
    $region54: #{tpu_custom_call.1} parent=1 // pred_check
      _
    $region55: #{tpu_custom_call.1} parent=1 // pred_check_branch
      %1010 = sbr.rel (0) target = $region57
    $region56: #{tpu_custom_call.1} parent=1 // pred_region
      %s1012 = ssub.s32 16, 16
      %1013 = vsyncadd [#allocation4], %s1012
      %s1015 = sshll.u32 [#allocation10], 4
      %s1016 = int_to_ptr.vmem [resolvable:$true] %s1015
      %1018 = dma.vmem_to_hbm [thread:$0]  %s1016, 16, %s9, [#allocation4]
    $region57: #{tpu_custom_call.1} parent=1 // pred_fallthru
      _
    // Predicated region
    $region58: #{tpu_custom_call.1} parent=1 // pred_check
      _
    $region59: #{tpu_custom_call.1} parent=1 // pred_check_branch
      %1020 = sbr.rel (0) target = $region61
    $region60: #{tpu_custom_call.1} parent=1 // pred_region
      %1021 = dma.done [#allocation4], 16
    $region61: #{tpu_custom_call.1} parent=1 // pred_fallthru
      _
    %1022 = vsyncpa [#allocation3], 1
    %1023 = vsyncpa [#allocation6], 1
    %1024 = vsyncpa [#allocation9], 1
    %1025 = vsyncpa [#allocation4], 1

</llo_original>
